<compile_context>
chip_gen: v7x
topology: tpu7x:2x2x1
jax: 0.10.0
libtpu: 0.0.40
codegen_flags: <defaults>
</compile_context>

<pallas_src>
import jax
import jax.numpy as jnp
from jax.experimental import pallas as pl
from jax.experimental.pallas import tpu as pltpu

BN_EPS = 1e-5
LANES = 128


def _round_up(v, m):
    return (v + m - 1) // m * m


def _vmem_limit_bytes():
    """~3/4 of physical VMEM, capped at 96 MiB (v5e/v6e: 128 MiB, v7x: 64 MiB)."""
    cap = 128 * 1024 * 1024
    try:
        cap = int(getattr(pltpu.get_tpu_info(), "vmem_capacity_bytes", cap))
    except Exception:
        cap = 64 * 1024 * 1024          # conservative fallback
    return max(32 * 1024 * 1024, min(3 * cap // 4, 96 * 1024 * 1024))


def _pick_tile_rows(ho, wo, cin, cp, budget_bytes):
    """Largest divisor TH of ho whose per-strip working set fits the budget.

    Accounts for the resident padded input image (lane-padded), the bf16
    im2col patches temp, the f32 matmul result and the double-buffered
    (lane-padded in VMEM) output block.
    """
    lane_cin = _round_up(max(cin, 1), LANES)
    resident = (ho + 2) * _round_up(wo + 2, 16) * lane_cin * 2      # bf16
    k_lanes = _round_up(9 * cin, LANES)

    def strip_bytes(th):
        rows = th * wo
        patches = rows * k_lanes * 2          # bf16 im2col temp
        acc = rows * cp * 4                   # f32 matmul result
        outblk = 2 * rows * LANES * 4         # double-buffered out block (VMEM)
        return patches + acc + outblk

    best = None
    for th in range(1, ho + 1):
        if ho % th == 0 and (th * wo) % 8 == 0:
            if resident + strip_bytes(th) <= budget_bytes:
                best = th
    if best is None:
        raise ValueError(f"no valid row tile for H={ho}, W={wo} in VMEM budget")
    return best


def _interp_matrix(out_sz, in_sz):
    """Row of bilinear (align_corners=True) interpolation weights, (out, in)."""
    if out_sz == 1:
        return jnp.zeros((1, in_sz), jnp.float32).at[0, 0].set(1.0)
    pos = jnp.arange(out_sz, dtype=jnp.float32) * ((in_sz - 1) / (out_sz - 1))
    lo = jnp.floor(pos).astype(jnp.int32)
    hi = jnp.minimum(lo + 1, in_sz - 1)
    w = pos - lo.astype(jnp.float32)
    rows = jnp.arange(out_sz)
    m = jnp.zeros((out_sz, in_sz), jnp.float32)
    m = m.at[rows, lo].add(1.0 - w)
    m = m.at[rows, hi].add(w)
    return m


def bilinear_upsample_align_corners(x, scale):
    """Gather-based nn.Upsample(mode='bilinear', align_corners=True), NCHW.

    Only used by the pure-JAX reference.
    """
    N, C, H, W = x.shape
    Ho, Wo = int(H * scale), int(W * scale)

    def src_coords(out_sz, in_sz):
        if out_sz == 1:
            return jnp.zeros((out_sz,), jnp.float32)
        return jnp.arange(out_sz, dtype=jnp.float32) * ((in_sz - 1) / (out_sz - 1))

    ys = src_coords(Ho, H)
    xs = src_coords(Wo, W)
    y0 = jnp.floor(ys).astype(jnp.int32)
    y1 = jnp.minimum(y0 + 1, H - 1)
    wy = (ys - y0.astype(jnp.float32))[None, None, :, None]
    x0 = jnp.floor(xs).astype(jnp.int32)
    x1 = jnp.minimum(x0 + 1, W - 1)
    wx = (xs - x0.astype(jnp.float32))[None, None, None, :]

    top = x[:, :, y0, :][:, :, :, x0] * (1.0 - wx) + x[:, :, y0, :][:, :, :, x1] * wx
    bot = x[:, :, y1, :][:, :, :, x0] * (1.0 - wx) + x[:, :, y1, :][:, :, :, x1] * wx
    return top * (1.0 - wy) + bot * wy


def up_conv_forward(x_nchw, w_oihw, gamma, beta, scale_factor, tile_rows=None):
    """Full up_conv forward.  x is NCHW, weights OIHW (PyTorch); returns NCHW."""
    N, Cin, H, W = x_nchw.shape
    Cout = w_oihw.shape[0]
    Cp = _round_up(Cout, LANES)
    Ho, Wo = int(H * scale_factor), int(W * scale_factor)

    vmem_limit = _vmem_limit_bytes()

    # --- bilinear upsample (align_corners) as two tiny matmuls in NHWC -------
    # TODO(synk): fuse upsample + zero-pad into the Pallas kernels to remove
    # this HBM round trip of the Cin-channel upsampled tensor entirely.
    x_nhwc = jnp.transpose(x_nchw, (0, 2, 3, 1)).astype(jnp.float32)
    Ah = _interp_matrix(Ho, H)
    Aw = _interp_matrix(Wo, W)
    x_up = jnp.einsum('oh,nhwc->nowc', Ah, x_nhwc)
    x_up = jnp.einsum('pw,nowc->nopc', Aw, x_up)
    # zero-pad H/W by 1 (conv padding=1), cast once to bf16 for the MXU
    x_pad = jnp.pad(x_up, ((0, 0), (1, 1), (1, 1), (0, 0))).astype(jnp.bfloat16)

    if tile_rows is None:
        TH = _pick_tile_rows(Ho, Wo, Cin, Cp, max(2 << 20, vmem_limit // 3))
    else:
        TH = tile_rows
    assert Ho % TH == 0 and (TH * Wo) % 8 == 0, (Ho, Wo, TH)
    S = Ho // TH                       # row strips per image
    rows_blk = TH * Wo
    rows_total = N * Ho * Wo
    NB = N * S                         # total grid blocks (keep even for v7x)

    # --- weights: OIHW -> (9*Cin, Cp) im2col matrix, Cout zero-padded --------
    K9 = 9 * Cin
    w_mat = jnp.zeros((K9, Cp), jnp.float32)
    w_mat = w_mat.at[:, :Cout].set(
        jnp.transpose(w_oihw, (2, 3, 1, 0)).reshape(K9, Cout))
    w_mat = w_mat.astype(jnp.bfloat16)

    # padded upsampled image stays resident across the strip axis (index map
    # ignores `s` -> the pipeline does not re-DMA it per strip)
    x_img_spec = pl.BlockSpec((None, Ho + 2, Wo + 2, Cin),
                              lambda n, s: (n, 0, 0, 0))
    w_spec = pl.BlockSpec((K9, Cp), lambda n, s: (0, 0))

    def conv_block(x_ref, w_ref):
        """In-kernel im2col + single K=9*Cin MXU matmul for the current strip."""
        s = pl.program_id(1)
        row0 = pl.multiple_of(s * TH, TH)
        x = x_ref[pl.ds(row0, TH + 2), :, :]            # (TH+2, Wo+2, Cin) bf16
        patches = jnp.concatenate(
            [x[dy:dy + TH, dx:dx + Wo, :] for dy in range(3) for dx in range(3)],
            axis=-1).reshape(TH * Wo, K9)               # (rows, 9*Cin) bf16
        return jnp.dot(patches, w_ref[...],
                       preferred_element_type=jnp.float32)   # (rows, Cp) f32

    # --- kernel 1: per-strip BN partial statistics only (no conv writeback) --
    def stats_kernel(x_ref, w_ref, stats_ref):
        acc = conv_block(x_ref, w_ref)
        psum = jnp.sum(acc, axis=0, keepdims=True)                  # (1, Cp)
        centered = acc - psum * (1.0 / rows_blk)
        stats_ref[0:1, :] = psum
        stats_ref[1:2, :] = jnp.sum(centered * centered, axis=0, keepdims=True)

    stats = pl.pallas_call(
        stats_kernel,
        out_shape=jax.ShapeDtypeStruct((NB, 2, Cp), jnp.float32),
        grid=(N, S),
        in_specs=[x_img_spec, w_spec],
        out_specs=pl.BlockSpec((None, 2, Cp), lambda n, s: (n * S + s, 0, 0)),
        compiler_params=pltpu.CompilerParams(
            dimension_semantics=("parallel", "parallel"),
            vmem_limit_bytes=vmem_limit),
    )(x_pad, w_mat)

    # --- tiny glue: Chan-combine (sum, M2) -> per-channel BN scale / shift ---
    cnt = jnp.float32(rows_total)
    blk_sum = stats[:, 0, :]                                         # (NB, Cp)
    blk_m2 = stats[:, 1, :]
    mean = blk_sum.sum(axis=0) / cnt
    blk_mean = blk_sum / jnp.float32(rows_blk)
    var = (blk_m2.sum(axis=0)
           + (jnp.float32(rows_blk) * (blk_mean - mean) ** 2).sum(axis=0)) / cnt
    var = jnp.maximum(var, 0.0)
    g = jnp.zeros((Cp,), jnp.float32).at[:Cout].set(gamma.astype(jnp.float32))
    b = jnp.zeros((Cp,), jnp.float32).at[:Cout].set(beta.astype(jnp.float32))
    scale_v = g * jax.lax.rsqrt(var + BN_EPS)
    shift_v = b - mean * scale_v
    scale = scale_v.reshape(1, Cp)
    shift = shift_v.reshape(1, Cp)

    # --- kernel 2: recompute conv (cheap K=9*Cin) + BN + ReLU, unpadded out --
    def bn_relu_kernel(x_ref, w_ref, scale_ref, shift_ref, o_ref):
        acc = conv_block(x_ref, w_ref)
        y = jnp.maximum(acc * scale_ref[...] + shift_ref[...], 0.0)
        o_ref[...] = y[:, :Cout]                  # write only real channels

    y_flat = pl.pallas_call(
        bn_relu_kernel,
        out_shape=jax.ShapeDtypeStruct((rows_total, Cout), jnp.float32),
        grid=(N, S),
        in_specs=[x_img_spec, w_spec,
                  pl.BlockSpec((1, Cp), lambda n, s: (0, 0)),
                  pl.BlockSpec((1, Cp), lambda n, s: (0, 0))],
        out_specs=pl.BlockSpec((rows_blk, Cout), lambda n, s: (n * S + s, 0)),
        compiler_params=pltpu.CompilerParams(
            dimension_semantics=("parallel", "parallel"),
            vmem_limit_bytes=vmem_limit),
    )(x_pad, w_mat, scale, shift)

    y = y_flat.reshape(N, Ho, Wo, Cout)
    return jnp.transpose(y, (0, 3, 1, 2))                           # NCHW


def _reference_forward(x_nchw, w_oihw, gamma, beta, scale_factor):
    """Pure-JAX reference with the same bf16-input / f32-accumulate conv."""
    x_up = bilinear_upsample_align_corners(x_nchw, scale_factor)
    x_nhwc = jnp.transpose(x_up, (0, 2, 3, 1)).astype(jnp.bfloat16).astype(jnp.float32)
    w_hwio = jnp.transpose(w_oihw, (2, 3, 1, 0)).astype(jnp.bfloat16).astype(jnp.float32)
    conv = jax.lax.conv_general_dilated(
        x_nhwc, w_hwio, window_strides=(1, 1), padding="SAME",
        dimension_numbers=("NHWC", "HWIO", "NHWC"))
    mean = conv.mean(axis=(0, 1, 2))
    var = ((conv - mean) ** 2).mean(axis=(0, 1, 2))
    y = (conv - mean) * jax.lax.rsqrt(var + BN_EPS) * gamma + beta
    y = jnp.maximum(y, 0.0)
    return jnp.transpose(y, (0, 3, 1, 2))


if __name__ == "__main__":
    # up_conv(ch_in=4, ch_out=8, scale_factor=2) on a (2, 4, 16, 16) input.
    N, Cin, H, W = 2, 4, 16, 16
    Cout, scale = 8, 2

    key = jax.random.PRNGKey(0)
    kx, kw = jax.random.split(key)
    x = jax.random.normal(kx, (N, Cin, H, W), dtype=jnp.float32)
    w = jax.random.normal(kw, (Cout, Cin, 3, 3), dtype=jnp.float32) * 0.1
    gamma = jnp.ones((Cout,), dtype=jnp.float32)    # BN default init
    beta = jnp.zeros((Cout,), dtype=jnp.float32)    # BN default init

    # tile_rows=8 -> grid (N=2, S=4): exercises the multi-strip halo slicing.
    out = jax.block_until_ready(
        up_conv_forward(x, w, gamma, beta, scale, tile_rows=8))
    assert out.shape == (N, Cout, H * scale, W * scale), out.shape

    ref = jax.block_until_ready(_reference_forward(x, w, gamma, beta, scale))
    err = float(jnp.max(jnp.abs(out - ref)))
    assert err < 1e-2, err
    print("KERNEL_OK")
</pallas_src>

<mosaic_0001>
module attributes {stable_mosaic.version = 11 : i64} {
  func.func @stats_kernel(%arg0: i32, %arg1: i32, %arg2: memref<1x34x34x4xbf16, #tpu.memory_space<vmem>>, %arg3: memref<36x128xbf16, #tpu.memory_space<vmem>>, %arg4: memref<1x2x128xf32, #tpu.memory_space<vmem>>) attributes {dimension_semantics = [#tpu.dimension_semantics<parallel>, #tpu.dimension_semantics<parallel>], iteration_bounds = array<i64: 2, 4>, scalar_prefetch = 0 : i64, scratch_operands = 0 : i64, tpu.core_type = #tpu.core_type<tc>, window_params = [{transform_indices = @transform_0, window_bounds = array<i64: 1, 34, 34, 4>}, {pipeline_mode = #tpu.pipeline_mode<synchronous>, transform_indices = @transform_1, window_bounds = array<i64: 36, 128>}, {transform_indices = @transform_2, window_bounds = array<i64: 1, 2, 128>}]} {
    %c8_i32 = arith.constant 8 : i32
    %0 = arith.muli %arg1, %c8_i32 : i32
    %1 = tpu.assume_multiple %0, 8 : i32
    %c0 = arith.constant 0 : index
    %2 = arith.index_cast %1 : i32 to index
    %c0_0 = arith.constant 0 : index
    %c0_1 = arith.constant 0 : index
    %3 = vector.load %arg2[%c0, %2, %c0_0, %c0_1] : memref<1x34x34x4xbf16, #tpu.memory_space<vmem>>, vector<1x10x34x4xbf16>
    %4 = vector.shape_cast %3 : vector<1x10x34x4xbf16> to vector<10x34x4xbf16>
    %5 = vector.extract_strided_slice %4 {offsets = [0, 0, 0], sizes = [8, 32, 4], strides = [1, 1, 1]} : vector<10x34x4xbf16> to vector<8x32x4xbf16>
    %6 = vector.extract_strided_slice %4 {offsets = [0, 1, 0], sizes = [8, 32, 4], strides = [1, 1, 1]} : vector<10x34x4xbf16> to vector<8x32x4xbf16>
    %7 = vector.extract_strided_slice %4 {offsets = [0, 2, 0], sizes = [8, 32, 4], strides = [1, 1, 1]} : vector<10x34x4xbf16> to vector<8x32x4xbf16>
    %8 = vector.extract_strided_slice %4 {offsets = [1, 0, 0], sizes = [8, 32, 4], strides = [1, 1, 1]} : vector<10x34x4xbf16> to vector<8x32x4xbf16>
    %9 = vector.extract_strided_slice %4 {offsets = [1, 1, 0], sizes = [8, 32, 4], strides = [1, 1, 1]} : vector<10x34x4xbf16> to vector<8x32x4xbf16>
    %10 = vector.extract_strided_slice %4 {offsets = [1, 2, 0], sizes = [8, 32, 4], strides = [1, 1, 1]} : vector<10x34x4xbf16> to vector<8x32x4xbf16>
    %11 = vector.extract_strided_slice %4 {offsets = [2, 0, 0], sizes = [8, 32, 4], strides = [1, 1, 1]} : vector<10x34x4xbf16> to vector<8x32x4xbf16>
    %12 = vector.extract_strided_slice %4 {offsets = [2, 1, 0], sizes = [8, 32, 4], strides = [1, 1, 1]} : vector<10x34x4xbf16> to vector<8x32x4xbf16>
    %13 = vector.extract_strided_slice %4 {offsets = [2, 2, 0], sizes = [8, 32, 4], strides = [1, 1, 1]} : vector<10x34x4xbf16> to vector<8x32x4xbf16>
    %14 = tpu.concatenate %5, %6, %7, %8, %9, %10, %11, %12, %13 in 2 : vector<8x32x4xbf16>, vector<8x32x4xbf16>, vector<8x32x4xbf16>, vector<8x32x4xbf16>, vector<8x32x4xbf16>, vector<8x32x4xbf16>, vector<8x32x4xbf16>, vector<8x32x4xbf16>, vector<8x32x4xbf16> -> vector<8x32x36xbf16>
    %15 = vector.shape_cast %14 : vector<8x32x36xbf16> to vector<256x36xbf16>
    %c0_2 = arith.constant 0 : index
    %c0_3 = arith.constant 0 : index
    %16 = vector.load %arg3[%c0_2, %c0_3] : memref<36x128xbf16, #tpu.memory_space<vmem>>, vector<36x128xbf16>
    %cst = arith.constant dense<0.000000e+00> : vector<256x128xf32>
    %17 = tpu.matmul %15, %16, %cst {dimension_numbers = #tpu.dot_dimension_numbers<[1], [0], [0], [1], [0, 0, 1, 1], [], []>} : vector<256x36xbf16>, vector<36x128xbf16>, vector<256x128xf32> -> vector<256x128xf32>
    %cst_4 = arith.constant dense<0.000000e+00> : vector<128xf32>
    %18 = vector.multi_reduction <add>, %17, %cst_4 [0] : vector<256x128xf32> to vector<128xf32>
    %19 = vector.shape_cast %18 : vector<128xf32> to vector<1x128xf32>
    %cst_5 = arith.constant 3.906250e-03 : f32
    %20 = vector.broadcast %cst_5 : f32 to vector<1x128xf32>
    %21 = arith.mulf %19, %20 : vector<1x128xf32>
    %22 = vector.broadcast %21 : vector<1x128xf32> to vector<256x128xf32>
    %23 = arith.subf %17, %22 : vector<256x128xf32>
    %c0_6 = arith.constant 0 : index
    %c0_7 = arith.constant 0 : index
    %c0_8 = arith.constant 0 : index
    %24 = vector.load %arg4[%c0_6, %c0_7, %c0_8] : memref<1x2x128xf32, #tpu.memory_space<vmem>>, vector<1x1x128xf32>
    %25 = vector.shape_cast %24 : vector<1x1x128xf32> to vector<1x128xf32>
    %26 = vector.shape_cast %19 : vector<1x128xf32> to vector<1x1x128xf32>
    tpu.vector_store %arg4[%c0_6, %c0_7, %c0_8], %26 {strides = array<i32>} : memref<1x2x128xf32, #tpu.memory_space<vmem>>, vector<1x1x128xf32>,
    %27 = arith.mulf %23, %23 : vector<256x128xf32>
    %cst_9 = arith.constant dense<0.000000e+00> : vector<128xf32>
    %28 = vector.multi_reduction <add>, %27, %cst_9 [0] : vector<256x128xf32> to vector<128xf32>
    %29 = vector.shape_cast %28 : vector<128xf32> to vector<1x128xf32>
    %c0_10 = arith.constant 0 : index
    %c1 = arith.constant 1 : index
    %c0_11 = arith.constant 0 : index
    %30 = vector.load %arg4[%c0_10, %c1, %c0_11] : memref<1x2x128xf32, #tpu.memory_space<vmem>>, vector<1x1x128xf32>
    %31 = vector.shape_cast %30 : vector<1x1x128xf32> to vector<1x128xf32>
    %32 = vector.shape_cast %29 : vector<1x128xf32> to vector<1x1x128xf32>
    tpu.vector_store %arg4[%c0_10, %c1, %c0_11], %32 {strides = array<i32>} : memref<1x2x128xf32, #tpu.memory_space<vmem>>, vector<1x1x128xf32>,
    return
  }
  func.func @transform_0(%arg0: i32, %arg1: i32) -> (i32, i32, i32, i32) {
    %c0_i32 = arith.constant 0 : i32
    %c0_i32_0 = arith.constant 0 : i32
    %c0_i32_1 = arith.constant 0 : i32
    %c0_i32_2 = arith.constant 0 : i32
    return %arg0, %c0_i32, %c0_i32_0, %c0_i32_1 : i32, i32, i32, i32
  }
  func.func @transform_1(%arg0: i32, %arg1: i32) -> (i32, i32) {
    %c0_i32 = arith.constant 0 : i32
    %c0_i32_0 = arith.constant 0 : i32
    %c0_i32_1 = arith.constant 0 : i32
    return %c0_i32, %c0_i32_0 : i32, i32
  }
  func.func @transform_2(%arg0: i32, %arg1: i32) -> (i32, i32, i32) {
    %c4_i32 = arith.constant 4 : i32
    %0 = arith.muli %arg0, %c4_i32 : i32
    %1 = arith.addi %0, %arg1 : i32
    %c0_i32 = arith.constant 0 : i32
    %c0_i32_0 = arith.constant 0 : i32
    %c0_i32_1 = arith.constant 0 : i32
    return %1, %c0_i32, %c0_i32_0 : i32, i32, i32
  }
}

</mosaic_0001>

<llo_original>
// kernel: tpu_custom_call.1
$region0: #{tpu_custom_call.1}
  #allocation0 [shape = 'u32[]', space=smem, size = 0x4, offset = 0x4, fixed_abs, tag = 'smem constant byte address 0x4 - core index']
  #allocation1 [shape = 'u32[144,128]{1,0:T(1,128)}', space=vmem, size = 0x12000, scoped, tag = 'internal scratch']
  %s0 = inlined_call_operand.vmem [shape: bf16[2,34,34,4], index: 0, kind: input, shape index: {}]
  %s1 = inlined_call_operand.vmem [shape: bf16[36,128], index: 1, kind: input, shape index: {}]
  %s2 = inlined_call_operand.hbm [shape: f32[8,2,128], index: 2, kind: output, shape index: {}]
  %s3 = sld [smem:[#allocation0]]
  $region41: #{tpu_custom_call.1} parent=0
    _
  %s5 = ssub.s32 1, %s3
  %s6 = scalar_select 0, %s5, %s3
  $region1: #{tpu_custom_call.1} parent=0
    #allocation2 [shape = 'u8[2048]{0}', space=vmem, size = 0x800, scoped, tag = 'output window, operand 0']
    #allocation3 [shape = 's32[2]{0}', space=sflag, size = 0x8, scoped, tag = 'scoped memory for tpu_custom_call.1']
    %7 = vsyncpa [#allocation3], 0
    %s8 = scalar_lea.sflag [#allocation3], 1
    %9 = vsyncpa %s8, 0
    loop: start=0, step=1, limit=10
    $region2: #{tpu_custom_call.1} parent=1 // loop_pre_header
      _
    $region3: #{tpu_custom_call.1} parent=1 // loop_header
      %s11 = sphi 0, %s15
      %p12 = scmp.ge.s32.totalorder %s11, 10
      %s18 = sphi 0, %s30
      %s19 = sphi 0, %s26
      %s20 = sphi 0, %s18
      %s21 = sphi 0, %s19
      %s22 = sphi 0, %s20
      %s23 = sphi 0, %s21
      %s33 = sphi 0, %s35
      %s36 = sphi 0, %s33
      %s37 = sphi 0, %s36
      %s53 = sphi 0, %s37
      %s57 = sphi 0, %s57
      %s59 = sphi 0, %s57
      %s60 = sphi 0, %s59
      %s74 = sphi 0, %s60
      %s84 = sphi 0, %s86
      %s87 = sphi 0, %s84
      %s88 = sphi 0, %s87
      %s104 = sphi 0, %s88
    $region4: #{tpu_custom_call.1} parent=1 // loop_header_branch
      %14 = sbr.rel (%p12) target = $region8
    $region5: #{tpu_custom_call.1} parent=1 // loop_body
      %s16 = ssub.s32 %s11, 1
      %s17 = ssub.s32 %s11, 2
      %s24 = sadd.s32 1, %s19
      %p25 = scmp.ge.s32.totalorder %s24, 4
      %s26 = scalar_select %p25, 0, %s24
      %s27 = sadd.s32 1, %s18
      %s28 = scalar_select %p25, %s27, %s18
      %p29 = scmp.ge.s32.totalorder %s28, 2
      %s30 = scalar_select %p29, 0, %s28
      %s31 = ssub.s32 %s18, %s30
      %p32 = scmp.eq.s32.totalorder %s31, 0
      %s34 = sadd.s32 %s33, 1
      %s35 = scalar_select %p32, %s33, %s34
      %p38 = pneg %p32
      %p39 = scmp.eq.s32.totalorder %s11, 7
      %p40 = por %p38, %p39
      %p41 = scmp.ne.s32.totalorder %s33, %s36
      %p42 = scmp.eq.s32.totalorder %s11, 0
      %p43 = por %p41, %p42
      %p44 = scmp.ne.s32.totalorder %s33, %s36
      %p45 = scmp.eq.s32.totalorder %s16, 7
      %p46 = por %p44, %p45
      %p47 = scmp.ne.s32.totalorder %s36, %s37
      %p48 = scmp.eq.s32.totalorder %s16, 0
      %p49 = por %p47, %p48
      %p50 = scmp.ne.s32.totalorder %s36, %s37
      %p51 = scmp.eq.s32.totalorder %s17, 7
      %p52 = por %p50, %p51
      %p54 = scmp.ne.s32.totalorder %s37, %s53
      %p55 = scmp.eq.s32.totalorder %s17, 0
      %p56 = por %p54, %p55
      %s58 = sadd.s32 %s57, 1
      %p61 = scmp.eq.s32.totalorder %s11, 7
      %p62 = scmp.ne.s32.totalorder %s57, %s59
      %p63 = scmp.eq.s32.totalorder %s11, 0
      %p64 = por %p62, %p63
      %p65 = scmp.ne.s32.totalorder %s57, %s59
      %p66 = scmp.eq.s32.totalorder %s16, 7
      %p67 = por %p65, %p66
      %p68 = scmp.ne.s32.totalorder %s59, %s60
      %p69 = scmp.eq.s32.totalorder %s16, 0
      %p70 = por %p68, %p69
      %p71 = scmp.ne.s32.totalorder %s59, %s60
      %p72 = scmp.eq.s32.totalorder %s17, 7
      %p73 = por %p71, %p72
      %p75 = scmp.ne.s32.totalorder %s60, %s74
      %p76 = scmp.eq.s32.totalorder %s17, 0
      %p77 = por %p75, %p76
      %s78 = smul.u32 %s18, 4
      %s79 = sadd.s32 %s78, %s19
      %s80 = smul.u32 %s30, 4
      %s81 = sadd.s32 %s80, %s26
      %s82 = ssub.s32 %s79, %s81
      %p83 = scmp.eq.s32.totalorder %s82, 0
      %s85 = sadd.s32 %s84, 1
      %s86 = scalar_select %p83, %s84, %s85
      %p89 = pneg %p83
      %p90 = scmp.eq.s32.totalorder %s11, 7
      %p91 = por %p89, %p90
      %p92 = scmp.ne.s32.totalorder %s84, %s87
      %p93 = scmp.eq.s32.totalorder %s11, 0
      %p94 = por %p92, %p93
      %p95 = scmp.ne.s32.totalorder %s84, %s87
      %p96 = scmp.eq.s32.totalorder %s16, 7
      %p97 = por %p95, %p96
      %p98 = scmp.ne.s32.totalorder %s87, %s88
      %p99 = scmp.eq.s32.totalorder %s16, 0
      %p100 = por %p98, %p99
      %p101 = scmp.ne.s32.totalorder %s87, %s88
      %p102 = scmp.eq.s32.totalorder %s17, 7
      %p103 = por %p101, %p102
      %p105 = scmp.ne.s32.totalorder %s88, %s104
      %p106 = scmp.eq.s32.totalorder %s17, 0
      %p107 = por %p105, %p106
      %p108 = scmp.le.s32.totalorder 1, %s11
      %p109 = scmp.lt.s32.totalorder %s11, 9
      %p110 = pnand %p108, %p109
      %p111 = pneg %p110
      // Predicated region
      $region9: #{tpu_custom_call.1} parent=5 // pred_check
        _
      $region10: #{tpu_custom_call.1} parent=5 // pred_check_branch
        %113 = sbr.rel (%p110) target = $region12
      $region11: #{tpu_custom_call.1} parent=5 // pred_region
        %s114 = ssub.s32 %s11, 1
        // Predicated region
        $region13: #{tpu_custom_call.1} parent=11 // pred_check
          %p115 = pneg %p70
        $region14: #{tpu_custom_call.1} parent=11 // pred_check_branch
          %117 = sbr.rel (%p115) target = $region16
        $region15: #{tpu_custom_call.1} parent=11 // pred_region
          _
        $region16: #{tpu_custom_call.1} parent=11 // pred_fallthru
          _
      $region12: #{tpu_custom_call.1} parent=5 // pred_fallthru
        _
      %p118 = scmp.lt.s32.totalorder %s11, 8
      // Predicated region
      $region17: #{tpu_custom_call.1} parent=5 // pred_check
        %p119 = pneg %p118
      $region18: #{tpu_custom_call.1} parent=5 // pred_check_branch
        %121 = sbr.rel (%p119) target = $region20
      $region19: #{tpu_custom_call.1} parent=5 // pred_region
        // Predicated region
        $region21: #{tpu_custom_call.1} parent=19 // pred_check
          %p122 = pneg %p43
        $region22: #{tpu_custom_call.1} parent=19 // pred_check_branch
          %124 = sbr.rel (%p122) target = $region24
        $region23: #{tpu_custom_call.1} parent=19 // pred_region
          %p125 = scmp.lt.s32.totalorder %s18, 1
          %s126 = scalar_select %p125, %s18, 1
          %s127 = smul.addr %s126, 170
          %s128 = smul.addr %s127, 4
          %s129 = scalar_lea.vmem %s0, %s128
        $region24: #{tpu_custom_call.1} parent=19 // pred_fallthru
          _
      $region20: #{tpu_custom_call.1} parent=5 // pred_fallthru
        _
      %p130 = scmp.le.s32.totalorder 1, %s11
      %p131 = scmp.lt.s32.totalorder %s11, 9
      %p132 = pnand %p130, %p131
      %p133 = pneg %p132
      // Predicated region
      $region25: #{tpu_custom_call.1} parent=5 // pred_check
        _
      $region26: #{tpu_custom_call.1} parent=5 // pred_check_branch
        %135 = sbr.rel (%p132) target = $region28
      $region27: #{tpu_custom_call.1} parent=5 // pred_region
        %s136 = ssub.s32 %s11, 1
        %p137 = scmp.lt.s32.totalorder %s20, 1
        %s138 = scalar_select %p137, %s20, 1
        %s139 = smul.addr %s138, 170
        %s140 = smul.addr %s139, 4
        %s141 = scalar_lea.vmem %s0, %s140
        %p142 = pneg %p49
        %p143 = pneg %p46
        %p144 = pneg %p70
        %p145 = pneg %p67
        %p146 = pneg %p100
        %p147 = pneg %p97
        %s148 = sand.u32 %s87, 1
        %s149 = scalar_lea.sflag [#allocation3], %s148
        %s150 = sand.u32 %s87, 1
        %s151 = smul.addr %s150, 2
        %s152 = scalar_lea.vmem [#allocation2], %s151
        %p153 = scmp.lt.s32.totalorder %s20, 1
        %s154 = scalar_select %p153, %s20, 1
        %s155 = smul.addr %s154, 170
        %s156 = smul.addr %s155, 4
        %s157 = scalar_lea.vmem %s0, %s156
        %s158 = smul.u32 %s20, 4
        %s159 = sadd.s32 %s158, %s21
        %s161 = smul.u32 %s21, 8
        %s162 = smul.u32 %s161, 5
        %s163 = smul.addr %s162, 4
        %s164 = scalar_lea.vmem %s157, %s163
        %v165 = vld [vmem:[%s164] sm:$0xf]
        %v166 = vld [vmem:[%s164 + $0x4] sm:$0xf]
        %v167 = vld [vmem:[%s164 + $0x8] sm:$0xf]
        %v168 = vld [vmem:[%s164 + $0xc] sm:$0xf]
        %v169 = vld [vmem:[%s164 + $0x10] sm:$0x1]
        %v170 = vld [vmem:[%s164 + $0x14] sm:$0xf]
        %v171 = vld [vmem:[%s164 + $0x18] sm:$0xf]
        %v172 = vld [vmem:[%s164 + $0x1c] sm:$0xf]
        %v173 = vld [vmem:[%s164 + $0x20] sm:$0xf]
        %v174 = vld [vmem:[%s164 + $0x24] sm:$0x1]
        %v175 = vld [vmem:[%s164 + $0x28] sm:$0xf]
        %v176 = vld [vmem:[%s164 + $0x2c] sm:$0xf]
        %v177 = vld [vmem:[%s164 + $0x30] sm:$0xf]
        %v178 = vld [vmem:[%s164 + $0x34] sm:$0xf]
        %v179 = vld [vmem:[%s164 + $0x38] sm:$0x1]
        %v180 = vld [vmem:[%s164 + $0x3c] sm:$0xf]
        %v181 = vld [vmem:[%s164 + $0x40] sm:$0xf]
        %v182 = vld [vmem:[%s164 + $0x44] sm:$0xf]
        %v183 = vld [vmem:[%s164 + $0x48] sm:$0xf]
        %v184 = vld [vmem:[%s164 + $0x4c] sm:$0x1]
        %v185 = vld [vmem:[%s164 + $0x50] sm:$0xf]
        %v186 = vld [vmem:[%s164 + $0x54] sm:$0xf]
        %v187 = vld [vmem:[%s164 + $0x58] sm:$0xf]
        %v188 = vld [vmem:[%s164 + $0x5c] sm:$0xf]
        %v189 = vld [vmem:[%s164 + $0x60] sm:$0x1]
        %v190 = vld [vmem:[%s164 + $0x64] sm:$0xf]
        %v191 = vld [vmem:[%s164 + $0x68] sm:$0xf]
        %v192 = vld [vmem:[%s164 + $0x6c] sm:$0xf]
        %v193 = vld [vmem:[%s164 + $0x70] sm:$0xf]
        %v194 = vld [vmem:[%s164 + $0x74] sm:$0x1]
        %v195 = vld [vmem:[%s164 + $0x78] sm:$0xf]
        %v196 = vld [vmem:[%s164 + $0x7c] sm:$0xf]
        %v197 = vld [vmem:[%s164 + $0x80] sm:$0xf]
        %v198 = vld [vmem:[%s164 + $0x84] sm:$0xf]
        %v199 = vld [vmem:[%s164 + $0x88] sm:$0x1]
        %v200 = vld [vmem:[%s164 + $0x8c] sm:$0xf]
        %v201 = vld [vmem:[%s164 + $0x90] sm:$0xf]
        %v202 = vld [vmem:[%s164 + $0x94] sm:$0xf]
        %v203 = vld [vmem:[%s164 + $0x98] sm:$0xf]
        %v204 = vld [vmem:[%s164 + $0x9c] sm:$0x1]
        %v205 = vld [vmem:[%s164 + $0xa0] sm:$0xf]
        %v206 = vld [vmem:[%s164 + $0xa4] sm:$0xf]
        %v207 = vld [vmem:[%s164 + $0xa8] sm:$0xf]
        %v208 = vld [vmem:[%s164 + $0xac] sm:$0xf]
        %v209 = vld [vmem:[%s164 + $0xb0] sm:$0x1]
        %v210 = vld [vmem:[%s164 + $0xb4] sm:$0xf]
        %v211 = vld [vmem:[%s164 + $0xb8] sm:$0xf]
        %v212 = vld [vmem:[%s164 + $0xbc] sm:$0xf]
        %v213 = vld [vmem:[%s164 + $0xc0] sm:$0xf]
        %v214 = vld [vmem:[%s164 + $0xc4] sm:$0x1]
        %v247 = vunpack.c.l.b16 %v165
        %v248 = vunpack.c.l.b16 %v166
        %v249 = vunpack.c.l.b16 %v167
        %v250 = vunpack.c.l.b16 %v168
        %v251 = vunpack.c.l.b16 %v170
        %v252 = vunpack.c.l.b16 %v171
        %v253 = vunpack.c.l.b16 %v172
        %v254 = vunpack.c.l.b16 %v173
        %v255 = vunpack.c.l.b16 %v175
        %v256 = vunpack.c.l.b16 %v176
        %v257 = vunpack.c.l.b16 %v177
        %v258 = vunpack.c.l.b16 %v178
        %v259 = vunpack.c.l.b16 %v180
        %v260 = vunpack.c.l.b16 %v181
        %v261 = vunpack.c.l.b16 %v182
        %v262 = vunpack.c.l.b16 %v183
        %v263 = vunpack.c.l.b16 %v185
        %v264 = vunpack.c.l.b16 %v186
        %v265 = vunpack.c.l.b16 %v187
        %v266 = vunpack.c.l.b16 %v188
        %v267 = vunpack.c.l.b16 %v190
        %v268 = vunpack.c.l.b16 %v191
        %v269 = vunpack.c.l.b16 %v192
        %v270 = vunpack.c.l.b16 %v193
        %v271 = vunpack.c.l.b16 %v195
        %v272 = vunpack.c.l.b16 %v196
        %v273 = vunpack.c.l.b16 %v197
        %v274 = vunpack.c.l.b16 %v198
        %v275 = vunpack.c.l.b16 %v200
        %v276 = vunpack.c.l.b16 %v201
        %v277 = vunpack.c.l.b16 %v202
        %v278 = vunpack.c.l.b16 %v203
        %v279 = vpack.c.b16 %v248, %v247
        %v280 = vpack.c.b16 %v250, %v249
        %v281 = vpack.c.b16 %v252, %v251
        %v282 = vpack.c.b16 %v254, %v253
        %v283 = vpack.c.b16 %v256, %v255
        %v284 = vpack.c.b16 %v258, %v257
        %v285 = vpack.c.b16 %v260, %v259
        %v286 = vpack.c.b16 %v262, %v261
        %v287 = vpack.c.b16 %v264, %v263
        %v288 = vpack.c.b16 %v266, %v265
        %v289 = vpack.c.b16 %v268, %v267
        %v290 = vpack.c.b16 %v270, %v269
        %v291 = vpack.c.b16 %v272, %v271
        %v292 = vpack.c.b16 %v274, %v273
        %v293 = vpack.c.b16 %v276, %v275
        %v294 = vpack.c.b16 %v278, %v277
        %v303 = vunpack.c.l.b16 %v169
        %v304 = vunpack.c.l.b16 %v174
        %v305 = vunpack.c.l.b16 %v179
        %v306 = vunpack.c.l.b16 %v184
        %v307 = vunpack.c.l.b16 %v189
        %v308 = vunpack.c.l.b16 %v194
        %v309 = vunpack.c.l.b16 %v199
        %v310 = vunpack.c.l.b16 %v204
        %v311 = vpack.c.b16 %v303, %v303
        %v312 = vpack.c.b16 %v304, %v304
        %v313 = vpack.c.b16 %v305, %v305
        %v314 = vpack.c.b16 %v306, %v306
        %v315 = vpack.c.b16 %v307, %v307
        %v316 = vpack.c.b16 %v308, %v308
        %v317 = vpack.c.b16 %v309, %v309
        %v318 = vpack.c.b16 %v310, %v310
        %vm319 = vsmask.f32 7424
        %v321 = vshrl.u32 %v279, 16
        %v323 = vshll.u32 %v279, 16
        %v325 = vrot.slane %v323, 1
        %v326 = vor.u32 %v321, %v325
        %v328 = vshll.u32 %v280, 16
        %v330 = vrot.slane %v328, 1
        %v331 = vsel %vm319, %v326, %v330
        %v332 = vshrl.u32 %v280, 16
        %v334 = vor.u32 %v332, %v330
        %v336 = vshll.u32 %v311, 16
        %v338 = vrot.slane %v336, 1
        %v339 = vsel %vm319, %v334, %v338
        %v341 = vshrl.u32 %v281, 16
        %v343 = vshll.u32 %v281, 16
        %v345 = vrot.slane %v343, 1
        %v346 = vor.u32 %v341, %v345
        %v348 = vshll.u32 %v282, 16
        %v350 = vrot.slane %v348, 1
        %v351 = vsel %vm319, %v346, %v350
        %v352 = vshrl.u32 %v282, 16
        %v354 = vor.u32 %v352, %v350
        %v356 = vshll.u32 %v312, 16
        %v358 = vrot.slane %v356, 1
        %v359 = vsel %vm319, %v354, %v358
        %v361 = vshrl.u32 %v283, 16
        %v363 = vshll.u32 %v283, 16
        %v365 = vrot.slane %v363, 1
        %v366 = vor.u32 %v361, %v365
        %v368 = vshll.u32 %v284, 16
        %v370 = vrot.slane %v368, 1
        %v371 = vsel %vm319, %v366, %v370
        %v372 = vshrl.u32 %v284, 16
        %v374 = vor.u32 %v372, %v370
        %v376 = vshll.u32 %v313, 16
        %v378 = vrot.slane %v376, 1
        %v379 = vsel %vm319, %v374, %v378
        %v381 = vshrl.u32 %v285, 16
        %v383 = vshll.u32 %v285, 16
        %v385 = vrot.slane %v383, 1
        %v386 = vor.u32 %v381, %v385
        %v388 = vshll.u32 %v286, 16
        %v390 = vrot.slane %v388, 1
        %v391 = vsel %vm319, %v386, %v390
        %v392 = vshrl.u32 %v286, 16
        %v394 = vor.u32 %v392, %v390
        %v396 = vshll.u32 %v314, 16
        %v398 = vrot.slane %v396, 1
        %v399 = vsel %vm319, %v394, %v398
        %v401 = vshrl.u32 %v287, 16
        %v403 = vshll.u32 %v287, 16
        %v405 = vrot.slane %v403, 1
        %v406 = vor.u32 %v401, %v405
        %v408 = vshll.u32 %v288, 16
        %v410 = vrot.slane %v408, 1
        %v411 = vsel %vm319, %v406, %v410
        %v412 = vshrl.u32 %v288, 16
        %v414 = vor.u32 %v412, %v410
        %v416 = vshll.u32 %v315, 16
        %v418 = vrot.slane %v416, 1
        %v419 = vsel %vm319, %v414, %v418
        %v421 = vshrl.u32 %v289, 16
        %v423 = vshll.u32 %v289, 16
        %v425 = vrot.slane %v423, 1
        %v426 = vor.u32 %v421, %v425
        %v428 = vshll.u32 %v290, 16
        %v430 = vrot.slane %v428, 1
        %v431 = vsel %vm319, %v426, %v430
        %v432 = vshrl.u32 %v290, 16
        %v434 = vor.u32 %v432, %v430
        %v436 = vshll.u32 %v316, 16
        %v438 = vrot.slane %v436, 1
        %v439 = vsel %vm319, %v434, %v438
        %v441 = vshrl.u32 %v291, 16
        %v443 = vshll.u32 %v291, 16
        %v445 = vrot.slane %v443, 1
        %v446 = vor.u32 %v441, %v445
        %v448 = vshll.u32 %v292, 16
        %v450 = vrot.slane %v448, 1
        %v451 = vsel %vm319, %v446, %v450
        %v452 = vshrl.u32 %v292, 16
        %v454 = vor.u32 %v452, %v450
        %v456 = vshll.u32 %v317, 16
        %v458 = vrot.slane %v456, 1
        %v459 = vsel %vm319, %v454, %v458
        %v461 = vshrl.u32 %v293, 16
        %v463 = vshll.u32 %v293, 16
        %v465 = vrot.slane %v463, 1
        %v466 = vor.u32 %v461, %v465
        %v468 = vshll.u32 %v294, 16
        %v470 = vrot.slane %v468, 1
        %v471 = vsel %vm319, %v466, %v470
        %v472 = vshrl.u32 %v294, 16
        %v474 = vor.u32 %v472, %v470
        %v476 = vshll.u32 %v318, 16
        %v478 = vrot.slane %v476, 1
        %v479 = vsel %vm319, %v474, %v478
        %480 = vrot.lane.b32.xlu0 %v331, 4
        %v481 = vpop.permute.xlu0 %480
        %482 = vrot.lane.b32.xlu0 %v339, 4
        %v483 = vpop.permute.xlu0 %482
        %484 = vrot.lane.b32.xlu0 %v351, 4
        %v485 = vpop.permute.xlu0 %484
        %486 = vrot.lane.b32.xlu0 %v359, 4
        %v487 = vpop.permute.xlu0 %486
        %488 = vrot.lane.b32.xlu0 %v371, 4
        %v489 = vpop.permute.xlu0 %488
        %490 = vrot.lane.b32.xlu0 %v379, 4
        %v491 = vpop.permute.xlu0 %490
        %492 = vrot.lane.b32.xlu0 %v391, 4
        %v493 = vpop.permute.xlu0 %492
        %494 = vrot.lane.b32.xlu0 %v399, 4
        %v495 = vpop.permute.xlu0 %494
        %496 = vrot.lane.b32.xlu0 %v411, 4
        %v497 = vpop.permute.xlu0 %496
        %498 = vrot.lane.b32.xlu0 %v419, 4
        %v499 = vpop.permute.xlu0 %498
        %500 = vrot.lane.b32.xlu0 %v431, 4
        %v501 = vpop.permute.xlu0 %500
        %502 = vrot.lane.b32.xlu0 %v439, 4
        %v503 = vpop.permute.xlu0 %502
        %504 = vrot.lane.b32.xlu0 %v451, 4
        %v505 = vpop.permute.xlu0 %504
        %506 = vrot.lane.b32.xlu0 %v459, 4
        %v507 = vpop.permute.xlu0 %506
        %508 = vrot.lane.b32.xlu0 %v471, 4
        %v509 = vpop.permute.xlu0 %508
        %510 = vrot.lane.b32.xlu0 %v479, 4
        %v511 = vpop.permute.xlu0 %510
        %vm512 = vcmask 1046528
        %v513 = vrot.slane %v279, 1
        %v514 = vrot.slane %v280, 1
        %v515 = vsel %vm512, %v513, %v514
        %v516 = vrot.slane %v311, 1
        %v517 = vsel %vm512, %v514, %v516
        %v518 = vrot.slane %v281, 1
        %v519 = vrot.slane %v282, 1
        %v520 = vsel %vm512, %v518, %v519
        %v521 = vrot.slane %v312, 1
        %v522 = vsel %vm512, %v519, %v521
        %v523 = vrot.slane %v283, 1
        %v524 = vrot.slane %v284, 1
        %v525 = vsel %vm512, %v523, %v524
        %v526 = vrot.slane %v313, 1
        %v527 = vsel %vm512, %v524, %v526
        %v528 = vrot.slane %v285, 1
        %v529 = vrot.slane %v286, 1
        %v530 = vsel %vm512, %v528, %v529
        %v531 = vrot.slane %v314, 1
        %v532 = vsel %vm512, %v529, %v531
        %v533 = vrot.slane %v287, 1
        %v534 = vrot.slane %v288, 1
        %v535 = vsel %vm512, %v533, %v534
        %v536 = vrot.slane %v315, 1
        %v537 = vsel %vm512, %v534, %v536
        %v538 = vrot.slane %v289, 1
        %v539 = vrot.slane %v290, 1
        %v540 = vsel %vm512, %v538, %v539
        %v541 = vrot.slane %v316, 1
        %v542 = vsel %vm512, %v539, %v541
        %v543 = vrot.slane %v291, 1
        %v544 = vrot.slane %v292, 1
        %v545 = vsel %vm512, %v543, %v544
        %v546 = vrot.slane %v317, 1
        %v547 = vsel %vm512, %v544, %v546
        %v548 = vrot.slane %v293, 1
        %v549 = vrot.slane %v294, 1
        %v550 = vsel %vm512, %v548, %v549
        %v551 = vrot.slane %v318, 1
        %v552 = vsel %vm512, %v549, %v551
        %553 = vrot.lane.b32.xlu0 %v515, 8
        %v554 = vpop.permute.xlu0 %553
        %555 = vrot.lane.b32.xlu0 %v517, 8
        %v556 = vpop.permute.xlu0 %555
        %557 = vrot.lane.b32.xlu0 %v520, 8
        %v558 = vpop.permute.xlu0 %557
        %559 = vrot.lane.b32.xlu0 %v522, 8
        %v560 = vpop.permute.xlu0 %559
        %561 = vrot.lane.b32.xlu0 %v525, 8
        %v562 = vpop.permute.xlu0 %561
        %563 = vrot.lane.b32.xlu0 %v527, 8
        %v564 = vpop.permute.xlu0 %563
        %565 = vrot.lane.b32.xlu0 %v530, 8
        %v566 = vpop.permute.xlu0 %565
        %567 = vrot.lane.b32.xlu0 %v532, 8
        %v568 = vpop.permute.xlu0 %567
        %569 = vrot.lane.b32.xlu0 %v535, 8
        %v570 = vpop.permute.xlu0 %569
        %571 = vrot.lane.b32.xlu0 %v537, 8
        %v572 = vpop.permute.xlu0 %571
        %573 = vrot.lane.b32.xlu0 %v540, 8
        %v574 = vpop.permute.xlu0 %573
        %575 = vrot.lane.b32.xlu0 %v542, 8
        %v576 = vpop.permute.xlu0 %575
        %577 = vrot.lane.b32.xlu0 %v545, 8
        %v578 = vpop.permute.xlu0 %577
        %579 = vrot.lane.b32.xlu0 %v547, 8
        %v580 = vpop.permute.xlu0 %579
        %581 = vrot.lane.b32.xlu0 %v550, 8
        %v582 = vpop.permute.xlu0 %581
        %583 = vrot.lane.b32.xlu0 %v552, 8
        %v584 = vpop.permute.xlu0 %583
        %v589 = vunpack.c.l.b16 %v205
        %v590 = vunpack.c.l.b16 %v206
        %v591 = vunpack.c.l.b16 %v207
        %v592 = vunpack.c.l.b16 %v208
        %v593 = vpack.c.b16 %v590, %v589
        %v594 = vpack.c.b16 %v592, %v591
        %595 = vrot.lane.b32.xlu0 %v281, 12
        %v596 = vpop.permute.xlu0 %595
        %597 = vrot.lane.b32.xlu0 %v282, 12
        %v598 = vpop.permute.xlu0 %597
        %599 = vrot.lane.b32.xlu0 %v283, 12
        %v600 = vpop.permute.xlu0 %599
        %601 = vrot.lane.b32.xlu0 %v284, 12
        %v602 = vpop.permute.xlu0 %601
        %603 = vrot.lane.b32.xlu0 %v285, 12
        %v604 = vpop.permute.xlu0 %603
        %605 = vrot.lane.b32.xlu0 %v286, 12
        %v606 = vpop.permute.xlu0 %605
        %607 = vrot.lane.b32.xlu0 %v287, 12
        %v608 = vpop.permute.xlu0 %607
        %609 = vrot.lane.b32.xlu0 %v288, 12
        %v610 = vpop.permute.xlu0 %609
        %611 = vrot.lane.b32.xlu0 %v289, 12
        %v612 = vpop.permute.xlu0 %611
        %613 = vrot.lane.b32.xlu0 %v290, 12
        %v614 = vpop.permute.xlu0 %613
        %615 = vrot.lane.b32.xlu0 %v291, 12
        %v616 = vpop.permute.xlu0 %615
        %617 = vrot.lane.b32.xlu0 %v292, 12
        %v618 = vpop.permute.xlu0 %617
        %619 = vrot.lane.b32.xlu0 %v293, 12
        %v620 = vpop.permute.xlu0 %619
        %621 = vrot.lane.b32.xlu0 %v294, 12
        %v622 = vpop.permute.xlu0 %621
        %623 = vrot.lane.b32.xlu0 %v593, 12
        %v624 = vpop.permute.xlu0 %623
        %625 = vrot.lane.b32.xlu0 %v594, 12
        %v626 = vpop.permute.xlu0 %625
        %v628 = vunpack.c.l.b16 %v209
        %v629 = vpack.c.b16 %v628, %v628
        %v631 = vshrl.u32 %v593, 16
        %v633 = vshll.u32 %v593, 16
        %v635 = vrot.slane %v633, 1
        %v636 = vor.u32 %v631, %v635
        %v638 = vshll.u32 %v594, 16
        %v640 = vrot.slane %v638, 1
        %v641 = vsel %vm319, %v636, %v640
        %v642 = vshrl.u32 %v594, 16
        %v644 = vor.u32 %v642, %v640
        %v646 = vshll.u32 %v629, 16
        %v648 = vrot.slane %v646, 1
        %v649 = vsel %vm319, %v644, %v648
        %650 = vrot.lane.b32.xlu0 %v351, 16
        %v651 = vpop.permute.xlu0 %650
        %652 = vrot.lane.b32.xlu0 %v359, 16
        %v653 = vpop.permute.xlu0 %652
        %654 = vrot.lane.b32.xlu0 %v371, 16
        %v655 = vpop.permute.xlu0 %654
        %656 = vrot.lane.b32.xlu0 %v379, 16
        %v657 = vpop.permute.xlu0 %656
        %658 = vrot.lane.b32.xlu0 %v391, 16
        %v659 = vpop.permute.xlu0 %658
        %660 = vrot.lane.b32.xlu0 %v399, 16
        %v661 = vpop.permute.xlu0 %660
        %662 = vrot.lane.b32.xlu0 %v411, 16
        %v663 = vpop.permute.xlu0 %662
        %664 = vrot.lane.b32.xlu0 %v419, 16
        %v665 = vpop.permute.xlu0 %664
        %666 = vrot.lane.b32.xlu0 %v431, 16
        %v667 = vpop.permute.xlu0 %666
        %668 = vrot.lane.b32.xlu0 %v439, 16
        %v669 = vpop.permute.xlu0 %668
        %670 = vrot.lane.b32.xlu0 %v451, 16
        %v671 = vpop.permute.xlu0 %670
        %672 = vrot.lane.b32.xlu0 %v459, 16
        %v673 = vpop.permute.xlu0 %672
        %674 = vrot.lane.b32.xlu0 %v471, 16
        %v675 = vpop.permute.xlu0 %674
        %676 = vrot.lane.b32.xlu0 %v479, 16
        %v677 = vpop.permute.xlu0 %676
        %678 = vrot.lane.b32.xlu0 %v641, 16
        %v679 = vpop.permute.xlu0 %678
        %680 = vrot.lane.b32.xlu0 %v649, 16
        %v681 = vpop.permute.xlu0 %680
        %v682 = vrot.slane %v593, 1
        %v683 = vrot.slane %v594, 1
        %v684 = vsel %vm512, %v682, %v683
        %v685 = vrot.slane %v629, 1
        %v686 = vsel %vm512, %v683, %v685
        %687 = vrot.lane.b32.xlu0 %v520, 20
        %v688 = vpop.permute.xlu0 %687
        %689 = vrot.lane.b32.xlu0 %v522, 20
        %v690 = vpop.permute.xlu0 %689
        %691 = vrot.lane.b32.xlu0 %v525, 20
        %v692 = vpop.permute.xlu0 %691
        %693 = vrot.lane.b32.xlu0 %v527, 20
        %v694 = vpop.permute.xlu0 %693
        %695 = vrot.lane.b32.xlu0 %v530, 20
        %v696 = vpop.permute.xlu0 %695
        %697 = vrot.lane.b32.xlu0 %v532, 20
        %v698 = vpop.permute.xlu0 %697
        %699 = vrot.lane.b32.xlu0 %v535, 20
        %v700 = vpop.permute.xlu0 %699
        %701 = vrot.lane.b32.xlu0 %v537, 20
        %v702 = vpop.permute.xlu0 %701
        %703 = vrot.lane.b32.xlu0 %v540, 20
        %v704 = vpop.permute.xlu0 %703
        %705 = vrot.lane.b32.xlu0 %v542, 20
        %v706 = vpop.permute.xlu0 %705
        %707 = vrot.lane.b32.xlu0 %v545, 20
        %v708 = vpop.permute.xlu0 %707
        %709 = vrot.lane.b32.xlu0 %v547, 20
        %v710 = vpop.permute.xlu0 %709
        %711 = vrot.lane.b32.xlu0 %v550, 20
        %v712 = vpop.permute.xlu0 %711
        %713 = vrot.lane.b32.xlu0 %v552, 20
        %v714 = vpop.permute.xlu0 %713
        %715 = vrot.lane.b32.xlu0 %v684, 20
        %v716 = vpop.permute.xlu0 %715
        %717 = vrot.lane.b32.xlu0 %v686, 20
        %v718 = vpop.permute.xlu0 %717
        %v723 = vunpack.c.l.b16 %v210
        %v724 = vunpack.c.l.b16 %v211
        %v725 = vunpack.c.l.b16 %v212
        %v726 = vunpack.c.l.b16 %v213
        %v727 = vpack.c.b16 %v724, %v723
        %v728 = vpack.c.b16 %v726, %v725
        %729 = vrot.lane.b32.xlu0 %v283, 24
        %v730 = vpop.permute.xlu0 %729
        %731 = vrot.lane.b32.xlu0 %v284, 24
        %v732 = vpop.permute.xlu0 %731
        %733 = vrot.lane.b32.xlu0 %v285, 24
        %v734 = vpop.permute.xlu0 %733
        %735 = vrot.lane.b32.xlu0 %v286, 24
        %v736 = vpop.permute.xlu0 %735
        %737 = vrot.lane.b32.xlu0 %v287, 24
        %v738 = vpop.permute.xlu0 %737
        %739 = vrot.lane.b32.xlu0 %v288, 24
        %v740 = vpop.permute.xlu0 %739
        %741 = vrot.lane.b32.xlu0 %v289, 24
        %v742 = vpop.permute.xlu0 %741
        %743 = vrot.lane.b32.xlu0 %v290, 24
        %v744 = vpop.permute.xlu0 %743
        %745 = vrot.lane.b32.xlu0 %v291, 24
        %v746 = vpop.permute.xlu0 %745
        %747 = vrot.lane.b32.xlu0 %v292, 24
        %v748 = vpop.permute.xlu0 %747
        %749 = vrot.lane.b32.xlu0 %v293, 24
        %v750 = vpop.permute.xlu0 %749
        %751 = vrot.lane.b32.xlu0 %v294, 24
        %v752 = vpop.permute.xlu0 %751
        %753 = vrot.lane.b32.xlu0 %v593, 24
        %v754 = vpop.permute.xlu0 %753
        %755 = vrot.lane.b32.xlu0 %v594, 24
        %v756 = vpop.permute.xlu0 %755
        %757 = vrot.lane.b32.xlu0 %v727, 24
        %v758 = vpop.permute.xlu0 %757
        %759 = vrot.lane.b32.xlu0 %v728, 24
        %v760 = vpop.permute.xlu0 %759
        %v762 = vunpack.c.l.b16 %v214
        %v763 = vpack.c.b16 %v762, %v762
        %v765 = vshrl.u32 %v727, 16
        %v767 = vshll.u32 %v727, 16
        %v769 = vrot.slane %v767, 1
        %v770 = vor.u32 %v765, %v769
        %v772 = vshll.u32 %v728, 16
        %v774 = vrot.slane %v772, 1
        %v775 = vsel %vm319, %v770, %v774
        %v776 = vshrl.u32 %v728, 16
        %v778 = vor.u32 %v776, %v774
        %v780 = vshll.u32 %v763, 16
        %v782 = vrot.slane %v780, 1
        %v783 = vsel %vm319, %v778, %v782
        %784 = vrot.lane.b32.xlu0 %v371, 28
        %v785 = vpop.permute.xlu0 %784
        %786 = vrot.lane.b32.xlu0 %v379, 28
        %v787 = vpop.permute.xlu0 %786
        %788 = vrot.lane.b32.xlu0 %v391, 28
        %v789 = vpop.permute.xlu0 %788
        %790 = vrot.lane.b32.xlu0 %v399, 28
        %v791 = vpop.permute.xlu0 %790
        %792 = vrot.lane.b32.xlu0 %v411, 28
        %v793 = vpop.permute.xlu0 %792
        %794 = vrot.lane.b32.xlu0 %v419, 28
        %v795 = vpop.permute.xlu0 %794
        %796 = vrot.lane.b32.xlu0 %v431, 28
        %v797 = vpop.permute.xlu0 %796
        %798 = vrot.lane.b32.xlu0 %v439, 28
        %v799 = vpop.permute.xlu0 %798
        %800 = vrot.lane.b32.xlu0 %v451, 28
        %v801 = vpop.permute.xlu0 %800
        %802 = vrot.lane.b32.xlu0 %v459, 28
        %v803 = vpop.permute.xlu0 %802
        %804 = vrot.lane.b32.xlu0 %v471, 28
        %v805 = vpop.permute.xlu0 %804
        %806 = vrot.lane.b32.xlu0 %v479, 28
        %v807 = vpop.permute.xlu0 %806
        %808 = vrot.lane.b32.xlu0 %v641, 28
        %v809 = vpop.permute.xlu0 %808
        %810 = vrot.lane.b32.xlu0 %v649, 28
        %v811 = vpop.permute.xlu0 %810
        %812 = vrot.lane.b32.xlu0 %v775, 28
        %v813 = vpop.permute.xlu0 %812
        %814 = vrot.lane.b32.xlu0 %v783, 28
        %v815 = vpop.permute.xlu0 %814
        %v816 = vrot.slane %v727, 1
        %v817 = vrot.slane %v728, 1
        %v818 = vsel %vm512, %v816, %v817
        %v819 = vrot.slane %v763, 1
        %v820 = vsel %vm512, %v817, %v819
        %821 = vrot.lane.b32.xlu0 %v525, 32
        %v822 = vpop.permute.xlu0 %821
        %823 = vrot.lane.b32.xlu0 %v527, 32
        %v824 = vpop.permute.xlu0 %823
        %825 = vrot.lane.b32.xlu0 %v530, 32
        %v826 = vpop.permute.xlu0 %825
        %827 = vrot.lane.b32.xlu0 %v532, 32
        %v828 = vpop.permute.xlu0 %827
        %829 = vrot.lane.b32.xlu0 %v535, 32
        %v830 = vpop.permute.xlu0 %829
        %831 = vrot.lane.b32.xlu0 %v537, 32
        %v832 = vpop.permute.xlu0 %831
        %833 = vrot.lane.b32.xlu0 %v540, 32
        %v834 = vpop.permute.xlu0 %833
        %835 = vrot.lane.b32.xlu0 %v542, 32
        %v836 = vpop.permute.xlu0 %835
        %837 = vrot.lane.b32.xlu0 %v545, 32
        %v838 = vpop.permute.xlu0 %837
        %839 = vrot.lane.b32.xlu0 %v547, 32
        %v840 = vpop.permute.xlu0 %839
        %841 = vrot.lane.b32.xlu0 %v550, 32
        %v842 = vpop.permute.xlu0 %841
        %843 = vrot.lane.b32.xlu0 %v552, 32
        %v844 = vpop.permute.xlu0 %843
        %845 = vrot.lane.b32.xlu0 %v684, 32
        %v846 = vpop.permute.xlu0 %845
        %847 = vrot.lane.b32.xlu0 %v686, 32
        %v848 = vpop.permute.xlu0 %847
        %849 = vrot.lane.b32.xlu0 %v818, 32
        %v850 = vpop.permute.xlu0 %849
        %851 = vrot.lane.b32.xlu0 %v820, 32
        %v852 = vpop.permute.xlu0 %851
        %vm853 = vcmask 31744
        %v855 = vsel %vm853, %v279, %v481
        %v857 = vsel %vm853, %v280, %v483
        %v859 = vsel %vm853, %v281, %v485
        %v861 = vsel %vm853, %v282, %v487
        %v863 = vsel %vm853, %v283, %v489
        %v865 = vsel %vm853, %v284, %v491
        %v867 = vsel %vm853, %v285, %v493
        %v869 = vsel %vm853, %v286, %v495
        %v871 = vsel %vm853, %v287, %v497
        %v873 = vsel %vm853, %v288, %v499
        %v875 = vsel %vm853, %v289, %v501
        %v877 = vsel %vm853, %v290, %v503
        %v879 = vsel %vm853, %v291, %v505
        %v881 = vsel %vm853, %v292, %v507
        %v883 = vsel %vm853, %v293, %v509
        %v885 = vsel %vm853, %v294, %v511
        %vm886 = vcmask 64512
        %v888 = vsel %vm886, %v855, %v554
        %v890 = vsel %vm886, %v857, %v556
        %v892 = vsel %vm886, %v859, %v558
        %v894 = vsel %vm886, %v861, %v560
        %v896 = vsel %vm886, %v863, %v562
        %v898 = vsel %vm886, %v865, %v564
        %v900 = vsel %vm886, %v867, %v566
        %v902 = vsel %vm886, %v869, %v568
        %v904 = vsel %vm886, %v871, %v570
        %v906 = vsel %vm886, %v873, %v572
        %v908 = vsel %vm886, %v875, %v574
        %v910 = vsel %vm886, %v877, %v576
        %v912 = vsel %vm886, %v879, %v578
        %v914 = vsel %vm886, %v881, %v580
        %v916 = vsel %vm886, %v883, %v582
        %v918 = vsel %vm886, %v885, %v584
        %vm919 = vcmask 97280
        %v921 = vsel %vm919, %v888, %v596
        %v923 = vsel %vm919, %v890, %v598
        %v925 = vsel %vm919, %v892, %v600
        %v927 = vsel %vm919, %v894, %v602
        %v929 = vsel %vm919, %v896, %v604
        %v931 = vsel %vm919, %v898, %v606
        %v933 = vsel %vm919, %v900, %v608
        %v935 = vsel %vm919, %v902, %v610
        %v937 = vsel %vm919, %v904, %v612
        %v939 = vsel %vm919, %v906, %v614
        %v941 = vsel %vm919, %v908, %v616
        %v943 = vsel %vm919, %v910, %v618
        %v945 = vsel %vm919, %v912, %v620
        %v947 = vsel %vm919, %v914, %v622
        %v949 = vsel %vm919, %v916, %v624
        %v951 = vsel %vm919, %v918, %v626
        %vm952 = vcmask 130048
        %v954 = vsel %vm952, %v921, %v651
        %v956 = vsel %vm952, %v923, %v653
        %v958 = vsel %vm952, %v925, %v655
        %v960 = vsel %vm952, %v927, %v657
        %v962 = vsel %vm952, %v929, %v659
        %v964 = vsel %vm952, %v931, %v661
        %v966 = vsel %vm952, %v933, %v663
        %v968 = vsel %vm952, %v935, %v665
        %v970 = vsel %vm952, %v937, %v667
        %v972 = vsel %vm952, %v939, %v669
        %v974 = vsel %vm952, %v941, %v671
        %v976 = vsel %vm952, %v943, %v673
        %v978 = vsel %vm952, %v945, %v675
        %v980 = vsel %vm952, %v947, %v677
        %v982 = vsel %vm952, %v949, %v679
        %v984 = vsel %vm952, %v951, %v681
        %vm985 = vcmask 162816
        %v987 = vsel %vm985, %v954, %v688
        %v989 = vsel %vm985, %v956, %v690
        %v991 = vsel %vm985, %v958, %v692
        %v993 = vsel %vm985, %v960, %v694
        %v995 = vsel %vm985, %v962, %v696
        %v997 = vsel %vm985, %v964, %v698
        %v999 = vsel %vm985, %v966, %v700
        %v1001 = vsel %vm985, %v968, %v702
        %v1003 = vsel %vm985, %v970, %v704
        %v1005 = vsel %vm985, %v972, %v706
        %v1007 = vsel %vm985, %v974, %v708
        %v1009 = vsel %vm985, %v976, %v710
        %v1011 = vsel %vm985, %v978, %v712
        %v1013 = vsel %vm985, %v980, %v714
        %v1015 = vsel %vm985, %v982, %v716
        %v1017 = vsel %vm985, %v984, %v718
        %vm1018 = vcmask 195584
        %v1020 = vsel %vm1018, %v987, %v730
        %v1022 = vsel %vm1018, %v989, %v732
        %v1024 = vsel %vm1018, %v991, %v734
        %v1026 = vsel %vm1018, %v993, %v736
        %v1028 = vsel %vm1018, %v995, %v738
        %v1030 = vsel %vm1018, %v997, %v740
        %v1032 = vsel %vm1018, %v999, %v742
        %v1034 = vsel %vm1018, %v1001, %v744
        %v1036 = vsel %vm1018, %v1003, %v746
        %v1038 = vsel %vm1018, %v1005, %v748
        %v1040 = vsel %vm1018, %v1007, %v750
        %v1042 = vsel %vm1018, %v1009, %v752
        %v1044 = vsel %vm1018, %v1011, %v754
        %v1046 = vsel %vm1018, %v1013, %v756
        %v1048 = vsel %vm1018, %v1015, %v758
        %v1050 = vsel %vm1018, %v1017, %v760
        %vm1051 = vcmask 228352
        %v1053 = vsel %vm1051, %v1020, %v785
        %v1055 = vsel %vm1051, %v1022, %v787
        %v1057 = vsel %vm1051, %v1024, %v789
        %v1059 = vsel %vm1051, %v1026, %v791
        %v1061 = vsel %vm1051, %v1028, %v793
        %v1063 = vsel %vm1051, %v1030, %v795
        %v1065 = vsel %vm1051, %v1032, %v797
        %v1067 = vsel %vm1051, %v1034, %v799
        %v1069 = vsel %vm1051, %v1036, %v801
        %v1071 = vsel %vm1051, %v1038, %v803
        %v1073 = vsel %vm1051, %v1040, %v805
        %v1075 = vsel %vm1051, %v1042, %v807
        %v1077 = vsel %vm1051, %v1044, %v809
        %v1079 = vsel %vm1051, %v1046, %v811
        %v1081 = vsel %vm1051, %v1048, %v813
        %v1083 = vsel %vm1051, %v1050, %v815
        %vm1084 = vcmask 261120
        %v1086 = vsel %vm1084, %v1053, %v822
        %v1088 = vsel %vm1084, %v1055, %v824
        %v1090 = vsel %vm1084, %v1057, %v826
        %v1092 = vsel %vm1084, %v1059, %v828
        %v1094 = vsel %vm1084, %v1061, %v830
        %v1096 = vsel %vm1084, %v1063, %v832
        %v1098 = vsel %vm1084, %v1065, %v834
        %v1100 = vsel %vm1084, %v1067, %v836
        %v1102 = vsel %vm1084, %v1069, %v838
        %v1104 = vsel %vm1084, %v1071, %v840
        %v1106 = vsel %vm1084, %v1073, %v842
        %v1108 = vsel %vm1084, %v1075, %v844
        %v1110 = vsel %vm1084, %v1077, %v846
        %v1112 = vsel %vm1084, %v1079, %v848
        %v1114 = vsel %vm1084, %v1081, %v850
        %v1116 = vsel %vm1084, %v1083, %v852
        %v1117 = vld [vmem:[%s1] sm:$0xf]
        %v1118 = vld [vmem:[%s1 + $0x4] sm:$0xf]
        %v1119 = vld [vmem:[%s1 + $0x8] sm:$0xf]
        %v1120 = vld [vmem:[%s1 + $0xc] sm:$0xf]
        %v1121 = vld [vmem:[%s1 + $0x10] sm:$0x3]
        %v1127 = vunpack.c.l.b16 %v1117
        %v1128 = vunpack.c.l.b16 %v1118
        %v1129 = vunpack.c.l.b16 %v1119
        %v1130 = vunpack.c.l.b16 %v1120
        %v1131 = vunpack.c.l.b16 %v1121
        %v1132 = vpack.c.b16 %v1128, %v1127
        %v1133 = vpack.c.b16 %v1130, %v1129
        %v1134 = vpack.c.b16 %v1131, %v1131
        %vm1137 = vcmask 293888
        %v1138 = vsel %vm1137, %v1086, 0
        %v1140 = vsel %vm1137, %v1088, 0
        %v1142 = vsel %vm1137, %v1090, 0
        %v1144 = vsel %vm1137, %v1092, 0
        %v1146 = vsel %vm1137, %v1094, 0
        %v1148 = vsel %vm1137, %v1096, 0
        %v1150 = vsel %vm1137, %v1098, 0
        %v1152 = vsel %vm1137, %v1100, 0
        %v1154 = vsel %vm1137, %v1102, 0
        %v1156 = vsel %vm1137, %v1104, 0
        %v1158 = vsel %vm1137, %v1106, 0
        %v1160 = vsel %vm1137, %v1108, 0
        %v1162 = vsel %vm1137, %v1110, 0
        %v1164 = vsel %vm1137, %v1112, 0
        %v1166 = vsel %vm1137, %v1114, 0
        %v1168 = vsel %vm1137, %v1116, 0
        %vm1170 = vcmask 1041408
        %v1172 = vsel %vm1170, %v1134, 0
        %1174 = vmatprep.subr.bf16.mxu0 0
        %1175 = vmatpush1.bf16.msra.mxu0 %v1132
        %1176 = vmatprep.subr.bf16.mxu0 0
        %1177 = vmatpush1.bf16.msra.mxu0 %v1133
        %1178 = vmatprep.subr.bf16.mxu0 0
        %1179 = vmatpush1.bf16.msra.mxu0 %v1172
        %1180 = vmatprep.subr.bf16.mxu0 0
        %1181 = vmatpush1.bf16.msra.mxu0 0
        %1182 = vmatprep.subr.bf16.mxu0 0
        %1183 = vmatpush1.bf16.msra.mxu0 0
        %1184 = vmatprep.subr.bf16.mxu0 0
        %1185 = vmatpush1.bf16.msra.mxu0 0
        %1186 = vmatprep.subr.bf16.mxu0 0
        %1187 = vmatpush1.bf16.msra.mxu0 0
        %1188 = vmatprep.subr.bf16.mxu0 0
        %1189 = vmatpush1.bf16.msra.mxu0 0
        %1190 = vmatprep.subr.bf16.mxu0 0
        %1191 = vmatpush1.bf16.msra.mxu0 0
        %1192 = vmatprep.subr.bf16.mxu0 0
        %1193 = vmatpush1.bf16.msra.mxu0 0
        %1194 = vmatprep.subr.bf16.mxu0 0
        %1195 = vmatpush1.bf16.msra.mxu0 0
        %1196 = vmatprep.subr.bf16.mxu0 0
        %1197 = vmatpush1.bf16.msra.mxu0 0
        %1198 = vmatprep.subr.bf16.mxu0 0
        %1199 = vmatpush1.bf16.msra.mxu0 0
        %1200 = vmatprep.subr.bf16.mxu0 0
        %1201 = vmatpush1.bf16.msra.mxu0 0
        %1202 = vmatprep.subr.bf16.mxu0 0
        %1203 = vmatpush1.bf16.msra.mxu0 0
        %1204 = vmatprep.subr.bf16.mxu0 0
        %1205 = vmatpush1.bf16.msra.mxu0 0
        %1206 = vmatprep.mubr.bf16.mxu0 0
        %1207 = vmatmul.mubr.bf16.gmra.mrb[0].mxu0 %v1138
        %v1208 = vpop.f32.mrb[0].mxu0
        %v1209 = vadd.f32 0.0, %v1208
        %v1210 = vpop.f32.mrb[0].mxu0
        %v1211 = vpop.f32.mrb[0].mxu0
        %v1212 = vadd.f32 0.0, %v1211
        %v1213 = vpop.f32.mrb[0].mxu0
        %1214 = vmatprep.mubr.bf16.mxu0 0
        %1215 = vmatmul.mubr.bf16.gmra.mrb[0].mxu0 %v1140
        %v1216 = vpop.f32.mrb[0].mxu0
        %v1217 = vadd.f32 0.0, %v1216
        %v1218 = vpop.f32.mrb[0].mxu0
        %v1219 = vpop.f32.mrb[0].mxu0
        %v1220 = vadd.f32 0.0, %v1219
        %v1221 = vpop.f32.mrb[0].mxu0
        %1222 = vmatprep.mubr.bf16.mxu0 0
        %1223 = vmatmul.mubr.bf16.gmra.mrb[0].mxu0 %v1142
        %v1224 = vpop.f32.mrb[0].mxu0
        %v1225 = vadd.f32 0.0, %v1224
        %v1226 = vpop.f32.mrb[0].mxu0
        %v1227 = vpop.f32.mrb[0].mxu0
        %v1228 = vadd.f32 0.0, %v1227
        %v1229 = vpop.f32.mrb[0].mxu0
        %1230 = vmatprep.mubr.bf16.mxu0 0
        %1231 = vmatmul.mubr.bf16.gmra.mrb[0].mxu0 %v1144
        %v1232 = vpop.f32.mrb[0].mxu0
        %v1233 = vadd.f32 0.0, %v1232
        %v1234 = vpop.f32.mrb[0].mxu0
        %v1235 = vpop.f32.mrb[0].mxu0
        %v1236 = vadd.f32 0.0, %v1235
        %v1237 = vpop.f32.mrb[0].mxu0
        %1238 = vmatprep.mubr.bf16.mxu0 0
        %1239 = vmatmul.mubr.bf16.gmra.mrb[0].mxu0 %v1146
        %v1240 = vpop.f32.mrb[0].mxu0
        %v1241 = vadd.f32 0.0, %v1240
        %v1242 = vpop.f32.mrb[0].mxu0
        %v1243 = vpop.f32.mrb[0].mxu0
        %v1244 = vadd.f32 0.0, %v1243
        %v1245 = vpop.f32.mrb[0].mxu0
        %1246 = vmatprep.mubr.bf16.mxu0 0
        %1247 = vmatmul.mubr.bf16.gmra.mrb[0].mxu0 %v1148
        %v1248 = vpop.f32.mrb[0].mxu0
        %v1249 = vadd.f32 0.0, %v1248
        %v1250 = vpop.f32.mrb[0].mxu0
        %v1251 = vpop.f32.mrb[0].mxu0
        %v1252 = vadd.f32 0.0, %v1251
        %v1253 = vpop.f32.mrb[0].mxu0
        %1254 = vmatprep.mubr.bf16.mxu0 0
        %1255 = vmatmul.mubr.bf16.gmra.mrb[0].mxu0 %v1150
        %v1256 = vpop.f32.mrb[0].mxu0
        %v1257 = vadd.f32 0.0, %v1256
        %v1258 = vpop.f32.mrb[0].mxu0
        %v1259 = vpop.f32.mrb[0].mxu0
        %v1260 = vadd.f32 0.0, %v1259
        %v1261 = vpop.f32.mrb[0].mxu0
        %1262 = vmatprep.mubr.bf16.mxu0 0
        %1263 = vmatmul.mubr.bf16.gmra.mrb[0].mxu0 %v1152
        %v1264 = vpop.f32.mrb[0].mxu0
        %v1265 = vadd.f32 0.0, %v1264
        %v1266 = vpop.f32.mrb[0].mxu0
        %v1267 = vpop.f32.mrb[0].mxu0
        %v1268 = vadd.f32 0.0, %v1267
        %v1269 = vpop.f32.mrb[0].mxu0
        %1270 = vmatprep.mubr.bf16.mxu0 0
        %1271 = vmatmul.mubr.bf16.gmra.mrb[0].mxu0 %v1154
        %v1272 = vpop.f32.mrb[0].mxu0
        %v1273 = vadd.f32 0.0, %v1272
        %v1274 = vpop.f32.mrb[0].mxu0
        %v1275 = vpop.f32.mrb[0].mxu0
        %v1276 = vadd.f32 0.0, %v1275
        %v1277 = vpop.f32.mrb[0].mxu0
        %1278 = vmatprep.mubr.bf16.mxu0 0
        %1279 = vmatmul.mubr.bf16.gmra.mrb[0].mxu0 %v1156
        %v1280 = vpop.f32.mrb[0].mxu0
        %v1281 = vadd.f32 0.0, %v1280
        %v1282 = vpop.f32.mrb[0].mxu0
        %v1283 = vpop.f32.mrb[0].mxu0
        %v1284 = vadd.f32 0.0, %v1283
        %v1285 = vpop.f32.mrb[0].mxu0
        %1286 = vmatprep.mubr.bf16.mxu0 0
        %1287 = vmatmul.mubr.bf16.gmra.mrb[0].mxu0 %v1158
        %v1288 = vpop.f32.mrb[0].mxu0
        %v1289 = vadd.f32 0.0, %v1288
        %v1290 = vpop.f32.mrb[0].mxu0
        %v1291 = vpop.f32.mrb[0].mxu0
        %v1292 = vadd.f32 0.0, %v1291
        %v1293 = vpop.f32.mrb[0].mxu0
        %1294 = vmatprep.mubr.bf16.mxu0 0
        %1295 = vmatmul.mubr.bf16.gmra.mrb[0].mxu0 %v1160
        %v1296 = vpop.f32.mrb[0].mxu0
        %v1297 = vadd.f32 0.0, %v1296
        %v1298 = vpop.f32.mrb[0].mxu0
        %v1299 = vpop.f32.mrb[0].mxu0
        %v1300 = vadd.f32 0.0, %v1299
        %v1301 = vpop.f32.mrb[0].mxu0
        %1302 = vmatprep.mubr.bf16.mxu0 0
        %1303 = vmatmul.mubr.bf16.gmra.mrb[0].mxu0 %v1162
        %v1304 = vpop.f32.mrb[0].mxu0
        %v1305 = vadd.f32 0.0, %v1304
        %v1306 = vpop.f32.mrb[0].mxu0
        %v1307 = vpop.f32.mrb[0].mxu0
        %v1308 = vadd.f32 0.0, %v1307
        %v1309 = vpop.f32.mrb[0].mxu0
        %1310 = vmatprep.mubr.bf16.mxu0 0
        %1311 = vmatmul.mubr.bf16.gmra.mrb[0].mxu0 %v1164
        %v1312 = vpop.f32.mrb[0].mxu0
        %v1313 = vadd.f32 0.0, %v1312
        %v1314 = vpop.f32.mrb[0].mxu0
        %v1315 = vpop.f32.mrb[0].mxu0
        %v1316 = vadd.f32 0.0, %v1315
        %v1317 = vpop.f32.mrb[0].mxu0
        %1318 = vmatprep.mubr.bf16.mxu0 0
        %1319 = vmatmul.mubr.bf16.gmra.mrb[0].mxu0 %v1166
        %v1320 = vpop.f32.mrb[0].mxu0
        %v1321 = vadd.f32 0.0, %v1320
        %v1322 = vpop.f32.mrb[0].mxu0
        %v1323 = vpop.f32.mrb[0].mxu0
        %v1324 = vadd.f32 0.0, %v1323
        %v1325 = vpop.f32.mrb[0].mxu0
        %1326 = vmatprep.mubr.bf16.mxu0 0
        %1327 = vmatmul.mubr.bf16.gmra.mrb[0].mxu0 %v1168
        %v1328 = vpop.f32.mrb[0].mxu0
        %v1329 = vadd.f32 0.0, %v1328
        %v1330 = vpop.f32.mrb[0].mxu0
        %v1331 = vpop.f32.mrb[0].mxu0
        %v1332 = vadd.f32 0.0, %v1331
        %v1333 = vpop.f32.mrb[0].mxu0
        %1334 = vdwg.mxu0
        %v1335 = vadd.f32 %v1209, %v1212
        %v1336 = vadd.f32 %v1335, %v1217
        %v1337 = vadd.f32 %v1336, %v1220
        %v1338 = vadd.f32 %v1337, %v1225
        %v1339 = vadd.f32 %v1338, %v1228
        %v1340 = vadd.f32 %v1339, %v1233
        %v1341 = vadd.f32 %v1340, %v1236
        %v1342 = vadd.f32 %v1341, %v1241
        %v1343 = vadd.f32 %v1342, %v1244
        %v1344 = vadd.f32 %v1343, %v1249
        %v1345 = vadd.f32 %v1344, %v1252
        %v1346 = vadd.f32 %v1345, %v1257
        %v1347 = vadd.f32 %v1346, %v1260
        %v1348 = vadd.f32 %v1347, %v1265
        %v1349 = vadd.f32 %v1348, %v1268
        %v1350 = vadd.f32 %v1349, %v1273
        %v1351 = vadd.f32 %v1350, %v1276
        %v1352 = vadd.f32 %v1351, %v1281
        %v1353 = vadd.f32 %v1352, %v1284
        %v1354 = vadd.f32 %v1353, %v1289
        %v1355 = vadd.f32 %v1354, %v1292
        %v1356 = vadd.f32 %v1355, %v1297
        %v1357 = vadd.f32 %v1356, %v1300
        %v1358 = vadd.f32 %v1357, %v1305
        %v1359 = vadd.f32 %v1358, %v1308
        %v1360 = vadd.f32 %v1359, %v1313
        %v1361 = vadd.f32 %v1360, %v1316
        %v1362 = vadd.f32 %v1361, %v1321
        %v1363 = vadd.f32 %v1362, %v1324
        %v1364 = vadd.f32 %v1363, %v1329
        %v1365 = vadd.f32 %v1364, %v1332
        %v1366 = vrot.slane %v1365, 4
        %v1367 = vadd.f32 %v1365, %v1366
        %v1368 = vrot.slane %v1367, 2
        %v1369 = vadd.f32 %v1367, %v1368
        %v1370 = vrot.slane %v1369, 1
        %v1371 = vadd.f32 %v1369, %v1370
        %v1372 = vmul.f32 %v1371, 0.00390625
        %v1373 = vsub.f32 %v1209, %v1372
        %v1374 = vsub.f32 %v1212, %v1372
        %v1375 = vsub.f32 %v1217, %v1372
        %v1376 = vsub.f32 %v1220, %v1372
        %v1377 = vsub.f32 %v1225, %v1372
        %v1378 = vsub.f32 %v1228, %v1372
        %v1379 = vsub.f32 %v1233, %v1372
        %v1380 = vsub.f32 %v1236, %v1372
        %v1381 = vsub.f32 %v1241, %v1372
        %v1382 = vsub.f32 %v1244, %v1372
        %v1383 = vsub.f32 %v1249, %v1372
        %v1384 = vsub.f32 %v1252, %v1372
        %v1385 = vsub.f32 %v1257, %v1372
        %v1386 = vsub.f32 %v1260, %v1372
        %v1387 = vsub.f32 %v1265, %v1372
        %v1388 = vsub.f32 %v1268, %v1372
        %v1389 = vsub.f32 %v1273, %v1372
        %v1390 = vsub.f32 %v1276, %v1372
        %v1391 = vsub.f32 %v1281, %v1372
        %v1392 = vsub.f32 %v1284, %v1372
        %v1393 = vsub.f32 %v1289, %v1372
        %v1394 = vsub.f32 %v1292, %v1372
        %v1395 = vsub.f32 %v1297, %v1372
        %v1396 = vsub.f32 %v1300, %v1372
        %v1397 = vsub.f32 %v1305, %v1372
        %v1398 = vsub.f32 %v1308, %v1372
        %v1399 = vsub.f32 %v1313, %v1372
        %v1400 = vsub.f32 %v1316, %v1372
        %v1401 = vsub.f32 %v1321, %v1372
        %v1402 = vsub.f32 %v1324, %v1372
        %v1403 = vsub.f32 %v1329, %v1372
        %v1404 = vsub.f32 %v1332, %v1372
        %1405 = vst [vmem:[%s152] sm:$0x1] %v1371
        %v1406 = vmul.f32 %v1373, %v1373
        %v1407 = vmul.f32 %v1374, %v1374
        %v1408 = vmul.f32 %v1375, %v1375
        %v1409 = vmul.f32 %v1376, %v1376
        %v1410 = vmul.f32 %v1377, %v1377
        %v1411 = vmul.f32 %v1378, %v1378
        %v1412 = vmul.f32 %v1379, %v1379
        %v1413 = vmul.f32 %v1380, %v1380
        %v1414 = vmul.f32 %v1381, %v1381
        %v1415 = vmul.f32 %v1382, %v1382
        %v1416 = vmul.f32 %v1383, %v1383
        %v1417 = vmul.f32 %v1384, %v1384
        %v1418 = vmul.f32 %v1385, %v1385
        %v1419 = vmul.f32 %v1386, %v1386
        %v1420 = vmul.f32 %v1387, %v1387
        %v1421 = vmul.f32 %v1388, %v1388
        %v1422 = vmul.f32 %v1389, %v1389
        %v1423 = vmul.f32 %v1390, %v1390
        %v1424 = vmul.f32 %v1391, %v1391
        %v1425 = vmul.f32 %v1392, %v1392
        %v1426 = vmul.f32 %v1393, %v1393
        %v1427 = vmul.f32 %v1394, %v1394
        %v1428 = vmul.f32 %v1395, %v1395
        %v1429 = vmul.f32 %v1396, %v1396
        %v1430 = vmul.f32 %v1397, %v1397
        %v1431 = vmul.f32 %v1398, %v1398
        %v1432 = vmul.f32 %v1399, %v1399
        %v1433 = vmul.f32 %v1400, %v1400
        %v1434 = vmul.f32 %v1401, %v1401
        %v1435 = vmul.f32 %v1402, %v1402
        %v1436 = vmul.f32 %v1403, %v1403
        %v1437 = vmul.f32 %v1404, %v1404
        %v1438 = vadd.f32 %v1406, %v1407
        %v1439 = vadd.f32 %v1438, %v1408
        %v1440 = vadd.f32 %v1439, %v1409
        %v1441 = vadd.f32 %v1440, %v1410
        %v1442 = vadd.f32 %v1441, %v1411
        %v1443 = vadd.f32 %v1442, %v1412
        %v1444 = vadd.f32 %v1443, %v1413
        %v1445 = vadd.f32 %v1444, %v1414
        %v1446 = vadd.f32 %v1445, %v1415
        %v1447 = vadd.f32 %v1446, %v1416
        %v1448 = vadd.f32 %v1447, %v1417
        %v1449 = vadd.f32 %v1448, %v1418
        %v1450 = vadd.f32 %v1449, %v1419
        %v1451 = vadd.f32 %v1450, %v1420
        %v1452 = vadd.f32 %v1451, %v1421
        %v1453 = vadd.f32 %v1452, %v1422
        %v1454 = vadd.f32 %v1453, %v1423
        %v1455 = vadd.f32 %v1454, %v1424
        %v1456 = vadd.f32 %v1455, %v1425
        %v1457 = vadd.f32 %v1456, %v1426
        %v1458 = vadd.f32 %v1457, %v1427
        %v1459 = vadd.f32 %v1458, %v1428
        %v1460 = vadd.f32 %v1459, %v1429
        %v1461 = vadd.f32 %v1460, %v1430
        %v1462 = vadd.f32 %v1461, %v1431
        %v1463 = vadd.f32 %v1462, %v1432
        %v1464 = vadd.f32 %v1463, %v1433
        %v1465 = vadd.f32 %v1464, %v1434
        %v1466 = vadd.f32 %v1465, %v1435
        %v1467 = vadd.f32 %v1466, %v1436
        %v1468 = vadd.f32 %v1467, %v1437
        %v1469 = vrot.slane %v1468, 4
        %v1470 = vadd.f32 %v1468, %v1469
        %v1471 = vrot.slane %v1470, 2
        %v1472 = vadd.f32 %v1470, %v1471
        %v1473 = vrot.slane %v1472, 1
        %v1474 = vadd.f32 %v1472, %v1473
        %1475 = vst [vmem:[%s152 + $0x1] sm:$0x1] %v1474
        %s1476 = sand.u32 %s87, 1
        %s1477 = scalar_lea.sflag [#allocation3], %s1476
        %s1478 = sand.u32 %s87, 1
        %s1479 = smul.addr %s1478, 2
        %s1480 = scalar_lea.vmem [#allocation2], %s1479
        // Predicated region
        $region29: #{tpu_custom_call.1} parent=27 // pred_check
          %p1481 = pneg %p97
        $region30: #{tpu_custom_call.1} parent=27 // pred_check_branch
          %1483 = sbr.rel (%p1481) target = $region32
        $region31: #{tpu_custom_call.1} parent=27 // pred_region
          %s1484 = smul.u32 %s20, 4
          %s1485 = sadd.s32 %s1484, %s21
          %s1487 = ssub.s32 32, 32
          %1488 = vsyncadd %s1477, %s1487
          %s1489 = smul.addr %s1485, 32
          %s1490 = scalar_lea.hbm %s2, %s1489
          %s1492 = sshll.u32 %s1480, 4
          %s1493 = int_to_ptr.vmem [resolvable:$true] %s1492
          %1495 = dma.vmem_to_hbm [thread:$0]  %s1493, 32, %s1490, %s1477
        $region32: #{tpu_custom_call.1} parent=27 // pred_fallthru
          _
      $region28: #{tpu_custom_call.1} parent=5 // pred_fallthru
        _
      %p1496 = scmp.le.s32.totalorder 2, %s11
      // Predicated region
      $region33: #{tpu_custom_call.1} parent=5 // pred_check
        %p1497 = pneg %p1496
      $region34: #{tpu_custom_call.1} parent=5 // pred_check_branch
        %1499 = sbr.rel (%p1497) target = $region36
      $region35: #{tpu_custom_call.1} parent=5 // pred_region
        %s1500 = ssub.s32 %s11, 2
        // Predicated region
        $region37: #{tpu_custom_call.1} parent=35 // pred_check
          %p1501 = pneg %p103
        $region38: #{tpu_custom_call.1} parent=35 // pred_check_branch
          %1503 = sbr.rel (%p1501) target = $region40
        $region39: #{tpu_custom_call.1} parent=35 // pred_region
          %s1504 = sand.u32 %s88, 1
          %s1505 = scalar_lea.sflag [#allocation3], %s1504
          %s1506 = sand.u32 %s88, 1
          %s1507 = smul.addr %s1506, 2
          %s1508 = scalar_lea.vmem [#allocation2], %s1507
          %1509 = dma.done %s1505, 32
        $region40: #{tpu_custom_call.1} parent=35 // pred_fallthru
          _
      $region36: #{tpu_custom_call.1} parent=5 // pred_fallthru
        _
    $region6: #{tpu_custom_call.1} parent=1 // loop_footer
      %s15 = sadd.s32 1, %s11
    $region7: #{tpu_custom_call.1} parent=1 // loop_footer_branch
      %10 = sbr.rel target = $region3
    $region8: #{tpu_custom_call.1} parent=1 // loop_exit
      _
    %1510 = vsyncpa [#allocation3], 1
    %s1511 = scalar_lea.sflag [#allocation3], 1
    %1512 = vsyncpa %s1511, 1

</llo_original>
